<compile_context>
chip_gen: v5e
topology: v5e:2x2
jax: 0.10.0
libtpu: 0.0.40
codegen_flags: <defaults>
</compile_context>

<pallas_src>
import functools

import numpy as np
import jax
import jax.numpy as jnp
from jax.experimental import pallas as pl
from jax.experimental.pallas import tpu as pltpu

LANE = 128           # TPU lane width
ROWS_PER_SAMPLE = 8  # pack each sample into 8 sublanes (full vregs for any batch)
TD_MAX = 4096        # lane-tile width: 2 inputs x 2 bufs x 64 x 4096 x 4B = 4 MiB VMEM
SPT_MAX = 8          # samples per row tile  -> row tile <= 64 rows


def _round_up(x, m):
    return (x + m - 1) // m * m


def _psnr_partial_kernel(x_ref, y_ref, acc_ref, *, n_chunks):
    """Accumulate lane-folded per-row sum of squared errors.

    x_ref, y_ref: (tn, td) input blocks in native dtype.
    acc_ref:      (tn, LANE) f32 output block; its index_map is constant along
                  the reduction (lane-tile) grid axis, so it stays resident in
                  VMEM and acts as the accumulator.
    """
    k = pl.program_id(1)

    @pl.when(k == 0)
    def _():
        acc_ref[...] = jnp.zeros_like(acc_ref)

    diff = x_ref[...].astype(jnp.float32) - y_ref[...].astype(jnp.float32)
    sq = diff * diff

    # Fold td lanes down to a 128-wide partial with plain VPU adds; the
    # cross-lane reduction is deferred to the (tiny) wrapper epilogue.
    partial = sq[:, 0:LANE]
    for j in range(1, n_chunks):
        partial = partial + sq[:, j * LANE:(j + 1) * LANE]
    acc_ref[...] += partial


def psnr_loss(pred, target, loss_weight=1.0, toY=False):
    """pred, target: (N, C, H, W) arrays (NCHW, same as the PyTorch module)."""
    assert pred.ndim == 4 and target.shape == pred.shape
    scale = 10.0 / np.log(10.0)

    if toY:
        # TODO(synk): fuse the RGB->Y weighted sum into the kernel to avoid the
        # extra HBM round-trip of the Y intermediates.
        assert pred.shape[1] == 3
        coef = jnp.asarray([65.481, 128.553, 24.966], dtype=jnp.float32).reshape(1, 3, 1, 1)
        pred = (jnp.sum(pred * coef, axis=1, keepdims=True) + 16.0) / 255.0
        target = (jnp.sum(target * coef, axis=1, keepdims=True) + 16.0) / 255.0

    n, c, h, w = pred.shape
    d = c * h * w
    r = ROWS_PER_SAMPLE

    # Flatten to (n, d) in native dtype (no wrapper up-cast; kernel promotes).
    x = pred.reshape(n, d)
    y = target.reshape(n, d)

    # Lane geometry: view each sample as r rows of dr_pad lanes (multiple of 128),
    # with dr_pad an exact multiple of the lane tile td.
    d1 = _round_up(d, r * LANE)
    dr = d1 // r
    td = min(TD_MAX, dr)
    dr_pad = _round_up(dr, td)
    d_total = r * dr_pad

    # Row tiling: spt samples (spt * 8 rows) per tile.
    spt = min(n, SPT_MAX)
    n_pad = _round_up(n, spt)
    tn = spt * r

    def prep(a):
        if d_total != d or n_pad != n:
            a = jnp.pad(a, ((0, n_pad - n), (0, d_total - d)))
        return a.reshape(n_pad * r, dr_pad)

    x2 = prep(x)
    y2 = prep(y)

    grid = (n_pad // spt, dr_pad // td)
    kernel = functools.partial(_psnr_partial_kernel, n_chunks=td // LANE)

    sums = pl.pallas_call(
        kernel,
        out_shape=jax.ShapeDtypeStruct((n_pad * r, LANE), jnp.float32),
        grid_spec=pltpu.PrefetchScalarGridSpec(
            num_scalar_prefetch=0,
            grid=grid,
            in_specs=[
                pl.BlockSpec((tn, td), lambda i, k: (i, k)),
                pl.BlockSpec((tn, td), lambda i, k: (i, k)),
            ],
            out_specs=pl.BlockSpec((tn, LANE), lambda i, k: (i, 0)),
        ),
        compiler_params=pltpu.CompilerParams(
            dimension_semantics=("parallel", "arbitrary"),
            vmem_limit_bytes=32 * 1024 * 1024,
        ),
    )(x2, y2)

    # Tiny epilogue (n * 8 * 128 floats): per-sample fold, divide by the TRUE d
    # (zero padding contributes nothing), eps, log, batch mean, scale.
    per_sample = jnp.sum(sums.reshape(n_pad, r * LANE), axis=1)[:n]
    mse = per_sample * jnp.float32(1.0 / d)
    return jnp.float32(loss_weight) * jnp.float32(scale) * jnp.mean(
        jnp.log(mse + jnp.float32(1e-8)))


def psnr_loss_ref(pred, target, loss_weight=1.0, toY=False):
    scale = 10.0 / np.log(10.0)
    pred = pred.astype(jnp.float32)
    target = target.astype(jnp.float32)
    if toY:
        coef = jnp.asarray([65.481, 128.553, 24.966], dtype=jnp.float32).reshape(1, 3, 1, 1)
        pred = (jnp.sum(pred * coef, axis=1, keepdims=True) + 16.0) / 255.0
        target = (jnp.sum(target * coef, axis=1, keepdims=True) + 16.0) / 255.0
    mse = jnp.mean((pred - target) ** 2, axis=(1, 2, 3))
    return loss_weight * scale * jnp.mean(jnp.log(mse + 1e-8))


if __name__ == "__main__":
    key = jax.random.PRNGKey(0)
    k1, k2, k3, k4 = jax.random.split(key, 4)

    # Primary small NCHW case (matches the spec's 4-D input contract).
    x = jax.random.uniform(k1, (2, 4, 16, 16), dtype=jnp.float32)
    y = jax.random.uniform(k2, (2, 4, 16, 16), dtype=jnp.float32)
    out = jax.block_until_ready(psnr_loss(x, y))
    ref = psnr_loss_ref(x, y)
    np.testing.assert_allclose(np.asarray(out), np.asarray(ref), rtol=1e-5, atol=1e-5)

    # Ragged case: d not a multiple of 1024, odd batch (exercises zero-padding).
    x3 = jax.random.uniform(k3, (3, 3, 20, 20), dtype=jnp.float32)
    y3 = jax.random.uniform(k4, (3, 3, 20, 20), dtype=jnp.float32)
    out3 = jax.block_until_ready(psnr_loss(x3, y3))
    ref3 = psnr_loss_ref(x3, y3)
    np.testing.assert_allclose(np.asarray(out3), np.asarray(ref3), rtol=1e-5, atol=1e-5)

    # toY path (RGB->Y glue in plain JAX, same kernel).
    outY = jax.block_until_ready(psnr_loss(x3, y3, toY=True))
    refY = psnr_loss_ref(x3, y3, toY=True)
    np.testing.assert_allclose(np.asarray(outY), np.asarray(refY), rtol=1e-5, atol=1e-5)

    print("KERNEL_OK")
</pallas_src>

<mosaic_0001>
module attributes {stable_mosaic.version = 11 : i64} {
  func.func @_psnr_partial_kernel(%arg0: i32, %arg1: i32, %arg2: memref<16x128xf32, #tpu.memory_space<vmem>>, %arg3: memref<16x128xf32, #tpu.memory_space<vmem>>, %arg4: memref<16x128xf32, #tpu.memory_space<vmem>>) attributes {dimension_semantics = [#tpu.dimension_semantics<parallel>, #tpu.dimension_semantics<arbitrary>], iteration_bounds = array<i64: 1, 1>, scalar_prefetch = 0 : i64, scratch_operands = 0 : i64, tpu.core_type = #tpu.core_type<tc>, window_params = [{transform_indices = @transform_0, window_bounds = array<i64: 16, 128>}, {transform_indices = @transform_1, window_bounds = array<i64: 16, 128>}, {transform_indices = @transform_2, window_bounds = array<i64: 16, 128>}]} {
    %c0_i32 = arith.constant 0 : i32
    %0 = arith.cmpi eq, %arg1, %c0_i32 : i32
    %1 = arith.extui %0 : i1 to i32
    %c0_i32_0 = arith.constant 0 : i32
    %2 = arith.cmpi ne, %1, %c0_i32_0 : i32
    scf.if %2 {
      %cst = arith.constant 0.000000e+00 : f32
      %10 = vector.broadcast %cst : f32 to vector<16x128xf32>
      %c0_8 = arith.constant 0 : index
      %c0_9 = arith.constant 0 : index
      %11 = vector.load %arg4[%c0_8, %c0_9] : memref<16x128xf32, #tpu.memory_space<vmem>>, vector<16x128xf32>
      tpu.vector_store %arg4[%c0_8, %c0_9], %10 {strides = array<i32>} : memref<16x128xf32, #tpu.memory_space<vmem>>, vector<16x128xf32>,
    } else {
    }
    %c0 = arith.constant 0 : index
    %c0_1 = arith.constant 0 : index
    %3 = vector.load %arg2[%c0, %c0_1] : memref<16x128xf32, #tpu.memory_space<vmem>>, vector<16x128xf32>
    %c0_2 = arith.constant 0 : index
    %c0_3 = arith.constant 0 : index
    %4 = vector.load %arg3[%c0_2, %c0_3] : memref<16x128xf32, #tpu.memory_space<vmem>>, vector<16x128xf32>
    %5 = arith.subf %3, %4 : vector<16x128xf32>
    %6 = arith.mulf %5, %5 : vector<16x128xf32>
    %c0_4 = arith.constant 0 : index
    %c0_5 = arith.constant 0 : index
    %7 = vector.load %arg4[%c0_4, %c0_5] : memref<16x128xf32, #tpu.memory_space<vmem>>, vector<16x128xf32>
    %8 = arith.addf %7, %6 : vector<16x128xf32>
    %c0_6 = arith.constant 0 : index
    %c0_7 = arith.constant 0 : index
    %9 = vector.load %arg4[%c0_6, %c0_7] : memref<16x128xf32, #tpu.memory_space<vmem>>, vector<16x128xf32>
    tpu.vector_store %arg4[%c0_6, %c0_7], %8 {strides = array<i32>} : memref<16x128xf32, #tpu.memory_space<vmem>>, vector<16x128xf32>,
    return
  }
  func.func @transform_0(%arg0: i32, %arg1: i32) -> (i32, i32) {
    %c0_i32 = arith.constant 0 : i32
    return %arg0, %arg1 : i32, i32
  }
  func.func @transform_1(%arg0: i32, %arg1: i32) -> (i32, i32) {
    %c0_i32 = arith.constant 0 : i32
    return %arg0, %arg1 : i32, i32
  }
  func.func @transform_2(%arg0: i32, %arg1: i32) -> (i32, i32) {
    %c0_i32 = arith.constant 0 : i32
    %c0_i32_0 = arith.constant 0 : i32
    return %arg0, %c0_i32 : i32, i32
  }
}

</mosaic_0001>

<llo_original>
// kernel: tpu_custom_call.1
$region0: #{tpu_custom_call.1}
  #allocation0 [shape = 'u32[]', space=smem, size = 0x4, offset = 0x4, fixed_abs, tag = 'smem constant byte address 0x4 - core index']
  #allocation1 [shape = 'u32[72,128]{1,0:T(1,128)}', space=vmem, size = 0x9000, scoped, tag = 'internal scratch']
  %s0 = inlined_call_operand.hbm [shape: f32[16,128], index: 0, kind: input, shape index: {}]
  %s1 = inlined_call_operand.hbm [shape: f32[16,128], index: 1, kind: input, shape index: {}]
  %s2 = inlined_call_operand.hbm [shape: f32[16,128], index: 2, kind: output, shape index: {}]
  %s3 = sld [smem:[#allocation0]]
  $region30: #{tpu_custom_call.1} parent=0
    _
  %s5 = ssub.s32 1, %s3
  %s6 = scalar_select 0, %s5, %s3
  $region1: #{tpu_custom_call.1} parent=0
    #allocation2 [shape = 'u8[8192]{0}', space=vmem, size = 0x2000, scoped, tag = 'input window, operand 0, single buffered']
    #allocation3 [shape = 's32[1]{0}', space=sflag, size = 0x4, scoped, tag = 'scoped memory for tpu_custom_call.1']
    #allocation4 [shape = 's32[1]{0}', space=sflag, size = 0x4, scoped, tag = 'scoped memory for tpu_custom_call.1']
    #allocation5 [shape = 'u8[8192]{0}', space=vmem, size = 0x2000, scoped, tag = 'input window, operand 1, single buffered']
    #allocation6 [shape = 's32[1]{0}', space=sflag, size = 0x4, scoped, tag = 'scoped memory for tpu_custom_call.1']
    #allocation7 [shape = 'u8[8192]{0}', space=vmem, size = 0x2000, scoped, tag = 'output window, operand 0, single buffered']
    %7 = vsyncpa [#allocation3], 0
    %8 = vsyncpa [#allocation6], 0
    %9 = vsyncpa [#allocation4], 0
    // Predicated region
    $region2: #{tpu_custom_call.1} parent=1 // pred_check
      _
    $region3: #{tpu_custom_call.1} parent=1 // pred_check_branch
      %11 = sbr.rel (0) target = $region5
    $region4: #{tpu_custom_call.1} parent=1 // pred_region
      %13 = vsyncadd [#allocation3], 0
      %s14 = sshll.u32 %s0, 4
      %s15 = int_to_ptr.hbm [resolvable:$true] %s14
      %s16 = sshll.u32 [#allocation2], 4
      %s17 = int_to_ptr.vmem [resolvable:$true] %s16
      %22 = dma.hbm_to_vmem [thread:$0]  %s15, 256, %s17, [#allocation3], 128, 128, 8
    $region5: #{tpu_custom_call.1} parent=1 // pred_fallthru
      _
    // Predicated region
    $region6: #{tpu_custom_call.1} parent=1 // pred_check
      _
    $region7: #{tpu_custom_call.1} parent=1 // pred_check_branch
      %24 = sbr.rel (0) target = $region9
    $region8: #{tpu_custom_call.1} parent=1 // pred_region
      %26 = vsyncadd [#allocation6], 0
      %s27 = sshll.u32 %s1, 4
      %s28 = int_to_ptr.hbm [resolvable:$true] %s27
      %s29 = sshll.u32 [#allocation5], 4
      %s30 = int_to_ptr.vmem [resolvable:$true] %s29
      %35 = dma.hbm_to_vmem [thread:$0]  %s28, 256, %s30, [#allocation6], 128, 128, 8
    $region9: #{tpu_custom_call.1} parent=1 // pred_fallthru
      _
    // Predicated region
    $region10: #{tpu_custom_call.1} parent=1 // pred_check
      _
    $region11: #{tpu_custom_call.1} parent=1 // pred_check_branch
      %37 = sbr.rel (0) target = $region13
    $region12: #{tpu_custom_call.1} parent=1 // pred_region
      %39 = dma.done [#allocation3], 256
    $region13: #{tpu_custom_call.1} parent=1 // pred_fallthru
      _
    // Predicated region
    $region14: #{tpu_custom_call.1} parent=1 // pred_check
      _
    $region15: #{tpu_custom_call.1} parent=1 // pred_check_branch
      %41 = sbr.rel (0) target = $region17
    $region16: #{tpu_custom_call.1} parent=1 // pred_region
      %43 = dma.done [#allocation6], 256
    $region17: #{tpu_custom_call.1} parent=1 // pred_fallthru
      _
    %p44 = scmp.eq.s32.totalorder 0, 0
    // Predicated region
    $region18: #{tpu_custom_call.1} parent=1 // pred_check
      %p45 = pneg %p44
    $region19: #{tpu_custom_call.1} parent=1 // pred_check_branch
      %47 = sbr.rel (%p45) target = $region21
    $region20: #{tpu_custom_call.1} parent=1 // pred_region
      %48 = vst [vmem:[#allocation7] sm:$0xff] 0.0
      %49 = vst [vmem:[#allocation7 + $0x8] sm:$0xff] 0.0
    $region21: #{tpu_custom_call.1} parent=1 // pred_fallthru
      _
    %v50 = vld [vmem:[#allocation2] sm:$0xff]
    %v51 = vld [vmem:[#allocation2 + $0x8] sm:$0xff]
    %v52 = vld [vmem:[#allocation5] sm:$0xff]
    %v53 = vld [vmem:[#allocation5 + $0x8] sm:$0xff]
    %v54 = vsub.f32 %v50, %v52
    %v55 = vsub.f32 %v51, %v53
    %v56 = vmul.f32 %v54, %v54
    %v57 = vmul.f32 %v55, %v55
    %v58 = vld [vmem:[#allocation7] sm:$0xff]
    %v59 = vld [vmem:[#allocation7 + $0x8] sm:$0xff]
    %v60 = vadd.f32 %v58, %v56
    %v61 = vadd.f32 %v59, %v57
    %62 = vst [vmem:[#allocation7] sm:$0xff] %v60
    %63 = vst [vmem:[#allocation7 + $0x8] sm:$0xff] %v61
    // Predicated region
    $region22: #{tpu_custom_call.1} parent=1 // pred_check
      _
    $region23: #{tpu_custom_call.1} parent=1 // pred_check_branch
      %65 = sbr.rel (0) target = $region25
    $region24: #{tpu_custom_call.1} parent=1 // pred_region
      %67 = vsyncadd [#allocation4], 0
      %s68 = sshll.u32 [#allocation7], 4
      %s69 = int_to_ptr.vmem [resolvable:$true] %s68
      %s70 = sshll.u32 %s2, 4
      %s71 = int_to_ptr.hbm [resolvable:$true] %s70
      %76 = dma.vmem_to_hbm [thread:$0]  %s69, 256, %s71, [#allocation4], 128, 128, 8
    $region25: #{tpu_custom_call.1} parent=1 // pred_fallthru
      _
    // Predicated region
    $region26: #{tpu_custom_call.1} parent=1 // pred_check
      _
    $region27: #{tpu_custom_call.1} parent=1 // pred_check_branch
      %78 = sbr.rel (0) target = $region29
    $region28: #{tpu_custom_call.1} parent=1 // pred_region
      %80 = dma.done [#allocation4], 256
    $region29: #{tpu_custom_call.1} parent=1 // pred_fallthru
      _
    %81 = vsyncpa [#allocation3], 1
    %82 = vsyncpa [#allocation6], 1
    %83 = vsyncpa [#allocation4], 1

</llo_original>
